<compile_context>
chip_gen: v5e
topology: v5e:2x2
jax: 0.10.0
libtpu: 0.0.40
codegen_flags: <defaults>
</compile_context>

<pallas_src>
import functools

import jax
import jax.numpy as jnp
from jax import lax
from jax.experimental import pallas as pl
from jax.experimental.pallas import tpu as pltpu


def _round_up(x, m):
    return ((x + m - 1) // m) * m


# ---------------------------------------------------------------------------
# VMEM budget / tiling plan
# ---------------------------------------------------------------------------
_HEADROOM_BYTES = 4 << 20      # slack left for compiler-internal scratch
_F32_TEMPS = 6                 # generous count of live (tm, cols) f32 temporaries


def _vmem_limit_bytes():
    """Generation-aware VMEM limit (v5e/v6e: 128 MiB physical, v7x: 64 MiB)."""
    cap = 0
    try:
        cap = int(getattr(pltpu.get_tpu_info(), "vmem_capacity_bytes", 0))
    except Exception:
        cap = 0
    if cap <= 0:
        cap = 64 << 20                      # conservative default (v7x-sized)
    if cap >= (128 << 20):
        return 96 << 20                     # v5e / v6e: use most of 128 MiB
    return (cap * 5) // 8                   # v7x: ~40 MiB of 64 MiB


def _row_tile(m_rows):
    """MXU-friendly anchor-row tile: 256 for big M, else M rounded up to 16."""
    if m_rows > 256:
        return 256
    return _round_up(max(m_rows, 16), 16)


def _tm_candidates(tm0):
    cands = []
    t = tm0
    while True:
        cands.append(t)
        if t <= 16:
            return cands
        t = max(16, _round_up(t // 2, 16))


def _plan(M, N, D_pad, itemsize, use_mask, vmem_limit, force_stream):
    """Choose resident vs streaming execution and the tile sizes."""
    budget = max(vmem_limit - _HEADROOM_BYTES, 8 << 20)

    # ---- resident: contrast matrix [D_pad, N_res] stays in VMEM ----
    if not force_stream:
        n_res = _round_up(N, 128)
        col_bytes = 2 * D_pad * n_res * itemsize        # pessimistic: 2 buffers
        tm0 = _row_tile(M)
        # v7x megacore: give the (only) parallel axis >= 2 row blocks; free
        # here because HBM traffic no longer depends on tm.
        if pl.cdiv(M, tm0) == 1 and tm0 >= 32:
            tm0 = _round_up(pl.cdiv(M, 2), 16)
        for tm in _tm_candidates(tm0):
            aux = (2 * tm * n_res * 2) if use_mask else (2 * (tm + n_res) * 4)
            per_block = (2 * tm * D_pad * itemsize
                         + _F32_TEMPS * tm * n_res * 4 + aux)
            if col_bytes + per_block <= budget:
                return dict(resident=True, tm=tm, tn=n_res,
                            M_pad=_round_up(M, tm), N_pad=n_res)

    # ---- streaming: tile rows and columns, online LSE accumulators ----
    n_cap = max(_round_up(N, 128), 128)
    tn_cands = [t for t in (512, 256, 128) if t <= n_cap] or [128]
    for tm in _tm_candidates(_row_tile(M)):
        for tn in tn_cands:
            aux = (2 * tm * tn * 2) if use_mask else (2 * (tm + tn) * 4)
            per = (2 * (tm * D_pad + D_pad * tn) * itemsize
                   + _F32_TEMPS * tm * tn * 4 + aux + tm * 128 * 4)
            if per <= budget:
                return dict(resident=False, tm=tm, tn=tn,
                            M_pad=_round_up(M, tm), N_pad=_round_up(N, tn))
    # Last resort: smallest tiles.
    return dict(resident=False, tm=16, tn=128,
                M_pad=_round_up(M, 16), N_pad=_round_up(N, 128))


# ---------------------------------------------------------------------------
# Resident kernels: one [tm, D] @ [D, N] matmul + full softmax per row block
# ---------------------------------------------------------------------------
def _resident_keep(i, tm, n_cols, n_valid_cols):
    row_ids = i * tm + lax.broadcasted_iota(jnp.int32, (tm, 1), 0)
    col_ids = lax.broadcasted_iota(jnp.int32, (1, n_cols), 1)
    keep = row_ids != col_ids                        # drop self-contrast diag
    if n_valid_cols < n_cols:                        # static: padded cols exist
        keep = jnp.logical_and(keep, col_ids < n_valid_cols)
    return keep


def _resident_epilogue(s, keep_f, posf, o_ref, loss_scale):
    # Row max over the whole (padded) tile equals PyTorch's logits_max because
    # the diagonal logit is >= 0 and padded columns are exactly 0.
    m = jnp.max(s, axis=1, keepdims=True)
    l = jnp.sum(jnp.exp(s - m) * keep_f, axis=1, keepdims=True)
    sp = jnp.sum(posf * s, axis=1, keepdims=True)
    pc = jnp.sum(posf, axis=1, keepdims=True)
    lse = m + jnp.log(l)
    mean_log_prob_pos = sp / jnp.maximum(pc, 1.0) - lse
    # Anchors with zero positives (incl. padded rows) yield 0 instead of the
    # NaN the PyTorch reference would produce; padded rows are sliced off.
    o_ref[...] = jnp.where(pc > 0.0, loss_scale * mean_log_prob_pos, 0.0)


def _resident_labels_kernel(rowlab_ref, collab_ref, rowfeat_ref, colfeat_ref,
                            o_ref, *, inv_temp, loss_scale, n_valid_cols):
    i = pl.program_id(0)
    tm, n_cols = rowfeat_ref.shape[0], colfeat_ref.shape[1]
    s = jnp.dot(rowfeat_ref[...], colfeat_ref[...],
                preferred_element_type=jnp.float32) * inv_temp
    keep = _resident_keep(i, tm, n_cols, n_valid_cols)
    posf = jnp.logical_and(rowlab_ref[...] == collab_ref[...],
                           keep).astype(jnp.float32)
    _resident_epilogue(s, keep.astype(jnp.float32), posf, o_ref, loss_scale)


def _resident_mask_kernel(mask_ref, rowfeat_ref, colfeat_ref, o_ref,
                          *, inv_temp, loss_scale, n_valid_cols):
    i = pl.program_id(0)
    tm, n_cols = rowfeat_ref.shape[0], colfeat_ref.shape[1]
    s = jnp.dot(rowfeat_ref[...], colfeat_ref[...],
                preferred_element_type=jnp.float32) * inv_temp
    keep_f = _resident_keep(i, tm, n_cols, n_valid_cols).astype(jnp.float32)
    posf = mask_ref[...].astype(jnp.float32) * keep_f
    _resident_epilogue(s, keep_f, posf, o_ref, loss_scale)


# ---------------------------------------------------------------------------
# Streaming kernels: online LSE over column tiles, merged (tm, 4) scratch:
#   lane 0 = running max m, lane 1 = sum exp(s - m) over kept cols,
#   lane 2 = sum(pos * s),  lane 3 = sum(pos)
# ---------------------------------------------------------------------------
def _stream_keep(i, j, tm, tn, n_valid_cols, has_col_pad):
    row_ids = i * tm + lax.broadcasted_iota(jnp.int32, (tm, 1), 0)
    col_ids = j * tn + lax.broadcasted_iota(jnp.int32, (1, tn), 1)
    keep = row_ids != col_ids
    if has_col_pad:                                  # static flag
        keep = jnp.logical_and(keep, col_ids < n_valid_cols)
    return keep


def _stream_update(s, keep_f, posf, o_ref, acc_ref, loss_scale):
    j = pl.program_id(1)

    @pl.when(j == 0)
    def _init():
        acc_ref[...] = jnp.zeros_like(acc_ref)
        acc_ref[:, 0:1] = jnp.full((acc_ref.shape[0], 1), -jnp.inf, jnp.float32)

    m_prev = acc_ref[:, 0:1]
    m_new = jnp.maximum(m_prev, jnp.max(s, axis=1, keepdims=True))
    p_sum = jnp.sum(jnp.exp(s - m_new) * keep_f, axis=1, keepdims=True)
    acc_ref[:, 1:2] = jnp.exp(m_prev - m_new) * acc_ref[:, 1:2] + p_sum
    acc_ref[:, 0:1] = m_new
    acc_ref[:, 2:3] = acc_ref[:, 2:3] + jnp.sum(posf * s, axis=1, keepdims=True)
    acc_ref[:, 3:4] = acc_ref[:, 3:4] + jnp.sum(posf, axis=1, keepdims=True)

    @pl.when(j == pl.num_programs(1) - 1)
    def _finalize():
        lse = acc_ref[:, 0:1] + jnp.log(acc_ref[:, 1:2])
        pc = acc_ref[:, 3:4]
        mean_log_prob_pos = acc_ref[:, 2:3] / jnp.maximum(pc, 1.0) - lse
        o_ref[...] = jnp.where(pc > 0.0, loss_scale * mean_log_prob_pos, 0.0)


def _stream_labels_kernel(rowlab_ref, collab_ref, rowfeat_ref, colfeat_ref,
                          o_ref, acc_ref,
                          *, inv_temp, loss_scale, n_valid_cols, has_col_pad):
    i, j = pl.program_id(0), pl.program_id(1)
    tm, tn = rowfeat_ref.shape[0], colfeat_ref.shape[1]
    s = jnp.dot(rowfeat_ref[...], colfeat_ref[...],
                preferred_element_type=jnp.float32) * inv_temp
    keep = _stream_keep(i, j, tm, tn, n_valid_cols, has_col_pad)
    posf = jnp.logical_and(rowlab_ref[...] == collab_ref[...],
                           keep).astype(jnp.float32)
    _stream_update(s, keep.astype(jnp.float32), posf, o_ref, acc_ref, loss_scale)


def _stream_mask_kernel(mask_ref, rowfeat_ref, colfeat_ref, o_ref, acc_ref,
                        *, inv_temp, loss_scale, n_valid_cols, has_col_pad):
    i, j = pl.program_id(0), pl.program_id(1)
    tm, tn = rowfeat_ref.shape[0], colfeat_ref.shape[1]
    s = jnp.dot(rowfeat_ref[...], colfeat_ref[...],
                preferred_element_type=jnp.float32) * inv_temp
    keep_f = _stream_keep(i, j, tm, tn, n_valid_cols, has_col_pad).astype(jnp.float32)
    posf = mask_ref[...].astype(jnp.float32) * keep_f
    _stream_update(s, keep_f, posf, o_ref, acc_ref, loss_scale)


# ---------------------------------------------------------------------------
# Wrapper
# ---------------------------------------------------------------------------
def supcon_loss(features, labels=None, mask=None, *, temperature=0.07,
                contrast_mode="all", base_temperature=0.07,
                compute_dtype=jnp.bfloat16, _force_stream=False):
    """JAX/Pallas equivalent of SupConLoss.forward ('all' and 'one' modes)."""
    if features.ndim < 3:
        raise ValueError("`features` needs to be [bsz, n_views, ...]")
    if features.ndim > 3:
        features = features.reshape(features.shape[0], features.shape[1], -1)
    bsz, n_views, dim = features.shape
    if labels is not None and mask is not None:
        raise ValueError("Cannot define both `labels` and `mask`")

    contrast_count = n_views
    # torch.cat(torch.unbind(features, dim=1), dim=0): view-major [N, D]
    contrast_feature = jnp.concatenate(
        [features[:, v, :] for v in range(n_views)], axis=0)
    if contrast_mode == "one":
        anchor_feature = features[:, 0, :]
        anchor_count = 1
    elif contrast_mode == "all":
        anchor_feature = contrast_feature
        anchor_count = contrast_count
    else:
        raise ValueError(f"Unknown mode: {contrast_mode}")

    M = anchor_count * bsz          # anchor rows
    N = contrast_count * bsz        # contrast columns
    D_pad = _round_up(dim, 128)
    itemsize = jnp.dtype(compute_dtype).itemsize

    vmem_limit = _vmem_limit_bytes()
    plan = _plan(M, N, D_pad, itemsize, use_mask=(mask is not None),
                 vmem_limit=vmem_limit, force_stream=_force_stream)
    resident, tm, tn = plan["resident"], plan["tm"], plan["tn"]
    M_pad, N_pad = plan["M_pad"], plan["N_pad"]

    row_feat = jnp.zeros((M_pad, D_pad), compute_dtype).at[:M, :dim].set(
        anchor_feature.astype(compute_dtype))
    # Pre-transposed contrast operand: every tile matmul is [tm, D] @ [D, tn].
    col_feat_t = jnp.zeros((D_pad, N_pad), compute_dtype).at[:dim, :N].set(
        contrast_feature.astype(compute_dtype).T)

    static_kw = dict(inv_temp=float(1.0 / temperature),
                     loss_scale=float(-(temperature / base_temperature)),
                     n_valid_cols=N)
    cparams_res = pltpu.CompilerParams(dimension_semantics=("parallel",),
                                       vmem_limit_bytes=vmem_limit)
    cparams_str = pltpu.CompilerParams(dimension_semantics=("parallel", "arbitrary"),
                                       vmem_limit_bytes=vmem_limit)
    out_shape = jax.ShapeDtypeStruct((M_pad, 1), jnp.float32)
    flops = 2 * M_pad * N_pad * D_pad
    transcend = M_pad * N_pad + M_pad

    if labels is None and mask is None:
        base_labels = jnp.arange(bsz, dtype=jnp.int32)    # SimCLR: eye mask
    elif labels is not None:
        labels = jnp.asarray(labels).reshape(-1)
        if labels.shape[0] != bsz:
            raise ValueError("Num of labels does not match num of features")
        base_labels = labels.astype(jnp.int32)
    else:
        base_labels = None

    def _cost(aux_bytes):
        col_stream = 1 if resident else (M_pad // tm)
        return pl.CostEstimate(
            flops=flops, transcendentals=transcend,
            bytes_accessed=(M_pad * D_pad + col_stream * D_pad * N_pad) * itemsize
            + aux_bytes + M_pad * 4)

    if base_labels is not None:
        # No [M, N] mask in HBM: only two tiny int32 label vectors.
        row_lab = jnp.full((M_pad, 1), -1, jnp.int32).at[:M, 0].set(
            jnp.tile(base_labels, anchor_count))
        col_lab = jnp.full((1, N_pad), -1, jnp.int32).at[0, :N].set(
            jnp.tile(base_labels, contrast_count))
        cost = _cost((M_pad + N_pad) * 4)
        if resident:
            per_row = pl.pallas_call(
                functools.partial(_resident_labels_kernel, **static_kw),
                out_shape=out_shape, grid=(M_pad // tm,),
                in_specs=[pl.BlockSpec((tm, 1), lambda i: (i, 0)),
                          pl.BlockSpec((1, N_pad), lambda i: (0, 0)),
                          pl.BlockSpec((tm, D_pad), lambda i: (i, 0)),
                          pl.BlockSpec((D_pad, N_pad), lambda i: (0, 0))],
                out_specs=pl.BlockSpec((tm, 1), lambda i: (i, 0)),
                compiler_params=cparams_res, cost_estimate=cost,
            )(row_lab, col_lab, row_feat, col_feat_t)
        else:
            per_row = pl.pallas_call(
                functools.partial(_stream_labels_kernel, **static_kw,
                                  has_col_pad=(N != N_pad)),
                out_shape=out_shape, grid=(M_pad // tm, N_pad // tn),
                in_specs=[pl.BlockSpec((tm, 1), lambda i, j: (i, 0)),
                          pl.BlockSpec((1, tn), lambda i, j: (0, j)),
                          pl.BlockSpec((tm, D_pad), lambda i, j: (i, 0)),
                          pl.BlockSpec((D_pad, tn), lambda i, j: (0, j))],
                out_specs=pl.BlockSpec((tm, 1), lambda i, j: (i, 0)),
                scratch_shapes=[pltpu.VMEM((tm, 4), jnp.float32)],
                compiler_params=cparams_str, cost_estimate=cost,
            )(row_lab, col_lab, row_feat, col_feat_t)
    else:
        # Explicit (possibly asymmetric) user mask: tiled bf16 mask fallback.
        # TODO(synk): non-binary float masks are rounded to bf16 on this path.
        full_mask = jnp.zeros((M_pad, N_pad), jnp.bfloat16).at[:M, :N].set(
            jnp.tile(jnp.asarray(mask).astype(jnp.bfloat16),
                     (anchor_count, contrast_count)))
        cost = _cost(M_pad * N_pad * 2)
        if resident:
            per_row = pl.pallas_call(
                functools.partial(_resident_mask_kernel, **static_kw),
                out_shape=out_shape, grid=(M_pad // tm,),
                in_specs=[pl.BlockSpec((tm, N_pad), lambda i: (i, 0)),
                          pl.BlockSpec((tm, D_pad), lambda i: (i, 0)),
                          pl.BlockSpec((D_pad, N_pad), lambda i: (0, 0))],
                out_specs=pl.BlockSpec((tm, 1), lambda i: (i, 0)),
                compiler_params=cparams_res, cost_estimate=cost,
            )(full_mask, row_feat, col_feat_t)
        else:
            per_row = pl.pallas_call(
                functools.partial(_stream_mask_kernel, **static_kw,
                                  has_col_pad=(N != N_pad)),
                out_shape=out_shape, grid=(M_pad // tm, N_pad // tn),
                in_specs=[pl.BlockSpec((tm, tn), lambda i, j: (i, j)),
                          pl.BlockSpec((tm, D_pad), lambda i, j: (i, 0)),
                          pl.BlockSpec((D_pad, tn), lambda i, j: (0, j))],
                out_specs=pl.BlockSpec((tm, 1), lambda i, j: (i, 0)),
                scratch_shapes=[pltpu.VMEM((tm, 4), jnp.float32)],
                compiler_params=cparams_str, cost_estimate=cost,
            )(full_mask, row_feat, col_feat_t)

    # loss.view(anchor_count, batch_size).mean() == mean over all M anchor rows.
    return jnp.mean(per_row[:M, 0])


# ---------------------------------------------------------------------------
# Pure-JAX reference mirroring the PyTorch forward
# ---------------------------------------------------------------------------
def supcon_loss_ref(features, labels=None, mask=None, *, temperature=0.07,
                    contrast_mode="all", base_temperature=0.07):
    bsz, n_views, _ = features.shape
    if labels is None and mask is None:
        mask = jnp.eye(bsz, dtype=jnp.float32)
    elif labels is not None:
        labels = jnp.asarray(labels).reshape(-1, 1)
        mask = (labels == labels.T).astype(jnp.float32)
    else:
        mask = jnp.asarray(mask).astype(jnp.float32)
    cf = jnp.concatenate([features[:, v, :] for v in range(n_views)], axis=0)
    if contrast_mode == "one":
        af = features[:, 0, :]
        anchor_count = 1
    else:
        af = cf
        anchor_count = n_views
    logits = jnp.dot(af, cf.T, precision=jax.lax.Precision.HIGHEST) / temperature
    logits = logits - jnp.max(logits, axis=1, keepdims=True)
    mask = jnp.tile(mask, (anchor_count, n_views))
    M, N = logits.shape
    logits_mask = 1.0 - jnp.eye(M, N, dtype=jnp.float32)
    mask = mask * logits_mask
    exp_logits = jnp.exp(logits) * logits_mask
    log_prob = logits - jnp.log(exp_logits.sum(1, keepdims=True))
    mean_log_prob_pos = (mask * log_prob).sum(1) / mask.sum(1)
    loss = -(temperature / base_temperature) * mean_log_prob_pos
    return loss.mean()


if __name__ == "__main__":
    key = jax.random.PRNGKey(0)
    k1, k2, k3, k4, k5, k6 = jax.random.split(key, 6)

    def check(got, want, tag, rtol=2e-3, atol=2e-3):
        got = jax.block_until_ready(got)
        assert jnp.allclose(got, want, rtol=rtol, atol=atol), (tag, got, want)

    # Primary small example: bsz=8, n_views=2, feat_dim=32 (resident plan).
    bsz, n_views, feat_dim = 8, 2, 32
    feats = jax.random.normal(k1, (bsz, n_views, feat_dim), dtype=jnp.float32)
    feats = feats / jnp.linalg.norm(feats, axis=-1, keepdims=True)
    labels = jax.random.randint(k2, (bsz,), 0, 3, dtype=jnp.int32)
    # Kernel feeds the MXU bf16 -> compare vs reference on bf16-rounded feats.
    feats_q = feats.astype(jnp.bfloat16).astype(jnp.float32)

    # 1) 'all' mode, labels                       (resident, labels kernel)
    check(supcon_loss(feats, labels=labels),
          supcon_loss_ref(feats_q, labels=labels), "all/labels")
    # 2) 'one' mode, labels (row padding)         (resident, labels kernel)
    check(supcon_loss(feats, labels=labels, contrast_mode="one"),
          supcon_loss_ref(feats_q, labels=labels, contrast_mode="one"), "one/labels")
    # 3) SimCLR degenerate case                   (resident, eye mask via labels)
    check(supcon_loss(feats), supcon_loss_ref(feats_q), "simclr")
    # 4) explicit mask                            (resident, bf16-mask kernel)
    eqmask = (labels[:, None] == labels[None, :]).astype(jnp.float32)
    ref_all_q = supcon_loss_ref(feats_q, labels=labels)
    check(supcon_loss(feats, mask=eqmask), ref_all_q, "mask/resident")
    # 5) forced streaming path (labels + mask kernels) on the small case
    check(supcon_loss(feats, labels=labels, _force_stream=True), ref_all_q,
          "labels/stream")
    check(supcon_loss(feats, mask=eqmask, _force_stream=True), ref_all_q,
          "mask/stream")
    # 6) resident with no column padding (N == N_pad == 128) + megacore row split
    bsz2 = 64
    feats2 = jax.random.normal(k3, (bsz2, 2, feat_dim), dtype=jnp.float32)
    feats2 = feats2 / jnp.linalg.norm(feats2, axis=-1, keepdims=True)
    labels2 = jax.random.randint(k4, (bsz2,), 0, 5, dtype=jnp.int32)
    feats2_q = feats2.astype(jnp.bfloat16).astype(jnp.float32)
    check(supcon_loss(feats2, labels=labels2),
          supcon_loss_ref(feats2_q, labels=labels2), "all/labels/N128")
    # 7) awkward size (M=N=288): resident, and forced streaming with multiple
    #    column tiles (online LSE across tiles, padded rows and columns).
    bsz3 = 144
    feats3 = jax.random.normal(k5, (bsz3, 2, feat_dim), dtype=jnp.float32)
    feats3 = feats3 / jnp.linalg.norm(feats3, axis=-1, keepdims=True)
    labels3 = jax.random.randint(k6, (bsz3,), 0, 10, dtype=jnp.int32)
    feats3_q = feats3.astype(jnp.bfloat16).astype(jnp.float32)
    ref3 = supcon_loss_ref(feats3_q, labels=labels3)
    check(supcon_loss(feats3, labels=labels3), ref3, "all/labels/288/resident")
    check(supcon_loss(feats3, labels=labels3, _force_stream=True), ref3,
          "all/labels/288/stream")
    # 8) loose end-to-end check vs full-f32 reference (bf16 quantization only)
    check(supcon_loss(feats, labels=labels),
          supcon_loss_ref(feats, labels=labels), "all/labels/f32ref",
          rtol=2e-2, atol=2e-2)

    print("KERNEL_OK")
</pallas_src>

<mosaic_0001>
module attributes {stable_mosaic.version = 11 : i64} {
  func.func @_resident_labels_kernel(%arg0: i32, %arg1: memref<16x1xi32, #tpu.memory_space<vmem>>, %arg2: memref<1x128xi32, #tpu.memory_space<vmem>>, %arg3: memref<16x128xbf16, #tpu.memory_space<vmem>>, %arg4: memref<128x128xbf16, #tpu.memory_space<vmem>>, %arg5: memref<16x1xf32, #tpu.memory_space<vmem>>) attributes {dimension_semantics = [#tpu.dimension_semantics<parallel>], iteration_bounds = array<i64: 1>, scalar_prefetch = 0 : i64, scratch_operands = 0 : i64, tpu.core_type = #tpu.core_type<tc>, window_params = [{transform_indices = @transform_0, window_bounds = array<i64: 16, 1>}, {pipeline_mode = #tpu.pipeline_mode<synchronous>, transform_indices = @transform_1, window_bounds = array<i64: 1, 128>}, {transform_indices = @transform_2, window_bounds = array<i64: 16, 128>}, {pipeline_mode = #tpu.pipeline_mode<synchronous>, transform_indices = @transform_3, window_bounds = array<i64: 128, 128>}, {transform_indices = @transform_4, window_bounds = array<i64: 16, 1>}]} {
    %c0 = arith.constant 0 : index
    %c0_0 = arith.constant 0 : index
    %0 = vector.load %arg3[%c0, %c0_0] : memref<16x128xbf16, #tpu.memory_space<vmem>>, vector<16x128xbf16>
    %c0_1 = arith.constant 0 : index
    %c0_2 = arith.constant 0 : index
    %1 = vector.load %arg4[%c0_1, %c0_2] : memref<128x128xbf16, #tpu.memory_space<vmem>>, vector<128x128xbf16>
    %cst = arith.constant dense<0.000000e+00> : vector<16x128xf32>
    %2 = tpu.matmul %0, %1, %cst {dimension_numbers = #tpu.dot_dimension_numbers<[1], [0], [0], [1], [0, 0, 1, 1], [], []>} : vector<16x128xbf16>, vector<128x128xbf16>, vector<16x128xf32> -> vector<16x128xf32>
    %cst_3 = arith.constant 14.2857141 : f32
    %3 = vector.broadcast %cst_3 : f32 to vector<16x128xf32>
    %4 = arith.mulf %2, %3 : vector<16x128xf32>
    %c16_i32 = arith.constant 16 : i32
    %5 = arith.muli %arg0, %c16_i32 : i32
    %6 = tpu.iota {dimensions = array<i32: 0>} : vector<16x1xi32>
    %7 = vector.broadcast %5 : i32 to vector<16x1xi32>
    %8 = arith.addi %7, %6 : vector<16x1xi32>
    %9 = tpu.iota {dimensions = array<i32: 1>} : vector<1x128xi32>
    %10 = vector.broadcast %8 : vector<16x1xi32> to vector<16x128xi32>
    %11 = vector.broadcast %9 : vector<1x128xi32> to vector<16x128xi32>
    %12 = arith.cmpi ne, %10, %11 : vector<16x128xi32>
    %c16_i32_4 = arith.constant 16 : i32
    %13 = vector.broadcast %c16_i32_4 : i32 to vector<1x128xi32>
    %14 = arith.cmpi slt, %9, %13 : vector<1x128xi32>
    %15 = vector.broadcast %14 : vector<1x128xi1> to vector<16x128xi1>
    %16 = arith.andi %12, %15 : vector<16x128xi1>
    %c0_5 = arith.constant 0 : index
    %c0_6 = arith.constant 0 : index
    %17 = vector.load %arg1[%c0_5, %c0_6] : memref<16x1xi32, #tpu.memory_space<vmem>>, vector<16x1xi32>
    %c0_7 = arith.constant 0 : index
    %c0_8 = arith.constant 0 : index
    %18 = vector.load %arg2[%c0_7, %c0_8] : memref<1x128xi32, #tpu.memory_space<vmem>>, vector<1x128xi32>
    %19 = vector.broadcast %17 : vector<16x1xi32> to vector<16x128xi32>
    %20 = vector.broadcast %18 : vector<1x128xi32> to vector<16x128xi32>
    %21 = arith.cmpi eq, %19, %20 : vector<16x128xi32>
    %22 = arith.andi %21, %16 : vector<16x128xi1>
    %23 = arith.extui %22 : vector<16x128xi1> to vector<16x128xi32>
    %24 = arith.sitofp %23 : vector<16x128xi32> to vector<16x128xf32>
    %25 = arith.extui %16 : vector<16x128xi1> to vector<16x128xi32>
    %26 = arith.sitofp %25 : vector<16x128xi32> to vector<16x128xf32>
    %cst_9 = arith.constant dense<0xFF800000> : vector<16xf32>
    %27 = vector.multi_reduction <maximumf>, %4, %cst_9 [1] : vector<16x128xf32> to vector<16xf32>
    %28 = vector.shape_cast %27 : vector<16xf32> to vector<16x1xf32>
    %29 = vector.broadcast %28 : vector<16x1xf32> to vector<16x128xf32>
    %30 = arith.subf %4, %29 : vector<16x128xf32>
    %31 = math.exp %30 : vector<16x128xf32>
    %32 = arith.mulf %31, %26 : vector<16x128xf32>
    %cst_10 = arith.constant dense<0.000000e+00> : vector<16xf32>
    %33 = vector.multi_reduction <add>, %32, %cst_10 [1] : vector<16x128xf32> to vector<16xf32>
    %34 = vector.shape_cast %33 : vector<16xf32> to vector<16x1xf32>
    %35 = arith.mulf %24, %4 : vector<16x128xf32>
    %cst_11 = arith.constant dense<0.000000e+00> : vector<16xf32>
    %36 = vector.multi_reduction <add>, %35, %cst_11 [1] : vector<16x128xf32> to vector<16xf32>
    %37 = vector.shape_cast %36 : vector<16xf32> to vector<16x1xf32>
    %cst_12 = arith.constant dense<0.000000e+00> : vector<16xf32>
    %38 = vector.multi_reduction <add>, %24, %cst_12 [1] : vector<16x128xf32> to vector<16xf32>
    %39 = vector.shape_cast %38 : vector<16xf32> to vector<16x1xf32>
    %40 = math.log %34 : vector<16x1xf32>
    %41 = arith.addf %28, %40 : vector<16x1xf32>
    %cst_13 = arith.constant 1.000000e+00 : f32
    %42 = vector.broadcast %cst_13 : f32 to vector<16x1xf32>
    %43 = arith.maximumf %39, %42 : vector<16x1xf32>
    %44 = arith.divf %37, %43 : vector<16x1xf32>
    %45 = arith.subf %44, %41 : vector<16x1xf32>
    %cst_14 = arith.constant 0.000000e+00 : f32
    %46 = vector.broadcast %cst_14 : f32 to vector<16x1xf32>
    %47 = arith.cmpf ogt, %39, %46 : vector<16x1xf32>
    %cst_15 = arith.constant -1.000000e+00 : f32
    %48 = vector.broadcast %cst_15 : f32 to vector<16x1xf32>
    %49 = arith.mulf %48, %45 : vector<16x1xf32>
    %cst_16 = arith.constant 0.000000e+00 : f32
    %50 = vector.broadcast %cst_16 : f32 to vector<16x1xf32>
    %51 = arith.select %47, %49, %50 : vector<16x1xi1>, vector<16x1xf32>
    %c0_17 = arith.constant 0 : index
    %c0_18 = arith.constant 0 : index
    %52 = vector.load %arg5[%c0_17, %c0_18] : memref<16x1xf32, #tpu.memory_space<vmem>>, vector<16x1xf32>
    tpu.vector_store %arg5[%c0_17, %c0_18], %51 {strides = array<i32>} : memref<16x1xf32, #tpu.memory_space<vmem>>, vector<16x1xf32>,
    return
  }
  func.func @transform_0(%arg0: i32) -> (i32, i32) {
    %c0_i32 = arith.constant 0 : i32
    %c0_i32_0 = arith.constant 0 : i32
    return %arg0, %c0_i32 : i32, i32
  }
  func.func @transform_1(%arg0: i32) -> (i32, i32) {
    %c0_i32 = arith.constant 0 : i32
    %c0_i32_0 = arith.constant 0 : i32
    %c0_i32_1 = arith.constant 0 : i32
    return %c0_i32, %c0_i32_0 : i32, i32
  }
  func.func @transform_2(%arg0: i32) -> (i32, i32) {
    %c0_i32 = arith.constant 0 : i32
    %c0_i32_0 = arith.constant 0 : i32
    return %arg0, %c0_i32 : i32, i32
  }
  func.func @transform_3(%arg0: i32) -> (i32, i32) {
    %c0_i32 = arith.constant 0 : i32
    %c0_i32_0 = arith.constant 0 : i32
    %c0_i32_1 = arith.constant 0 : i32
    return %c0_i32, %c0_i32_0 : i32, i32
  }
  func.func @transform_4(%arg0: i32) -> (i32, i32) {
    %c0_i32 = arith.constant 0 : i32
    %c0_i32_0 = arith.constant 0 : i32
    return %arg0, %c0_i32 : i32, i32
  }
}

</mosaic_0001>

<llo_original>
// kernel: tpu_custom_call.1
$region0: #{tpu_custom_call.1}
  #allocation0 [shape = 'u32[]', space=smem, size = 0x4, offset = 0x4, fixed_abs, tag = 'smem constant byte address 0x4 - core index']
  #allocation1 [shape = 'u32[72,128]{1,0:T(1,128)}', space=vmem, size = 0x9000, scoped, tag = 'internal scratch']
  %s0 = inlined_call_operand.vmem [shape: s32[16,1], index: 0, kind: input, shape index: {}]
  %s1 = inlined_call_operand.vmem [shape: s32[1,128], index: 1, kind: input, shape index: {}]
  %s2 = inlined_call_operand.vmem [shape: bf16[16,128], index: 2, kind: input, shape index: {}]
  %s3 = inlined_call_operand.hbm [shape: bf16[128,128], index: 3, kind: input, shape index: {}]
  %s4 = inlined_call_operand.vmem [shape: f32[16,1], index: 4, kind: output, shape index: {}]
  %s5 = sld [smem:[#allocation0]]
  $region30: #{tpu_custom_call.1} parent=0
    _
  %s7 = ssub.s32 1, %s5
  %s8 = scalar_select 0, %s7, %s5
  $region1: #{tpu_custom_call.1} parent=0
    #allocation2 [shape = 'u8[32768]{0}', space=vmem, size = 0x8000, scoped, tag = 'input window, operand 3, single buffered']
    #allocation3 [shape = 's32[1]{0}', space=sflag, size = 0x4, scoped, tag = 'scoped memory for tpu_custom_call.1']
    %9 = vsyncpa [#allocation3], 0
    // Predicated region
    $region2: #{tpu_custom_call.1} parent=1 // pred_check
      _
    $region3: #{tpu_custom_call.1} parent=1 // pred_check_branch
      %11 = sbr.rel (0) target = $region5
    $region4: #{tpu_custom_call.1} parent=1 // pred_region
      _
    $region5: #{tpu_custom_call.1} parent=1 // pred_fallthru
      _
    // Predicated region
    $region6: #{tpu_custom_call.1} parent=1 // pred_check
      _
    $region7: #{tpu_custom_call.1} parent=1 // pred_check_branch
      %13 = sbr.rel (0) target = $region9
    $region8: #{tpu_custom_call.1} parent=1 // pred_region
      _
    $region9: #{tpu_custom_call.1} parent=1 // pred_fallthru
      _
    // Predicated region
    $region10: #{tpu_custom_call.1} parent=1 // pred_check
      _
    $region11: #{tpu_custom_call.1} parent=1 // pred_check_branch
      %15 = sbr.rel (0) target = $region13
    $region12: #{tpu_custom_call.1} parent=1 // pred_region
      _
    $region13: #{tpu_custom_call.1} parent=1 // pred_fallthru
      _
    // Predicated region
    $region14: #{tpu_custom_call.1} parent=1 // pred_check
      _
    $region15: #{tpu_custom_call.1} parent=1 // pred_check_branch
      %17 = sbr.rel (0) target = $region17
    $region16: #{tpu_custom_call.1} parent=1 // pred_region
      %19 = vsyncadd [#allocation3], 0
      %s20 = sshll.u32 %s3, 4
      %s21 = int_to_ptr.hbm [resolvable:$true] %s20
      %s22 = sshll.u32 [#allocation2], 4
      %s23 = int_to_ptr.vmem [resolvable:$true] %s22
      %28 = dma.hbm_to_vmem [thread:$0]  %s21, 1024, %s23, [#allocation3], 64, 64, 4
    $region17: #{tpu_custom_call.1} parent=1 // pred_fallthru
      _
    // Predicated region
    $region18: #{tpu_custom_call.1} parent=1 // pred_check
      _
    $region19: #{tpu_custom_call.1} parent=1 // pred_check_branch
      %30 = sbr.rel (0) target = $region21
    $region20: #{tpu_custom_call.1} parent=1 // pred_region
      %32 = dma.done [#allocation3], 1024
    $region21: #{tpu_custom_call.1} parent=1 // pred_fallthru
      _
    %v33 = vld [vmem:[%s2] sm:$0xf]
    %v34 = vld [vmem:[%s2 + $0x4] sm:$0xf]
    %v35 = vld [vmem:[#allocation2] sm:$0xf]
    %v36 = vld [vmem:[#allocation2 + $0x4] sm:$0xf]
    %v37 = vld [vmem:[#allocation2 + $0x8] sm:$0xf]
    %v38 = vld [vmem:[#allocation2 + $0xc] sm:$0xf]
    %v39 = vld [vmem:[#allocation2 + $0x10] sm:$0xf]
    %v40 = vld [vmem:[#allocation2 + $0x14] sm:$0xf]
    %v41 = vld [vmem:[#allocation2 + $0x18] sm:$0xf]
    %v42 = vld [vmem:[#allocation2 + $0x1c] sm:$0xf]
    %v43 = vld [vmem:[#allocation2 + $0x20] sm:$0xf]
    %v44 = vld [vmem:[#allocation2 + $0x24] sm:$0xf]
    %v45 = vld [vmem:[#allocation2 + $0x28] sm:$0xf]
    %v46 = vld [vmem:[#allocation2 + $0x2c] sm:$0xf]
    %v47 = vld [vmem:[#allocation2 + $0x30] sm:$0xf]
    %v48 = vld [vmem:[#allocation2 + $0x34] sm:$0xf]
    %v49 = vld [vmem:[#allocation2 + $0x38] sm:$0xf]
    %v50 = vld [vmem:[#allocation2 + $0x3c] sm:$0xf]
    %v53 = vunpack.c.l.b16 %v33
    %v54 = vunpack.c.l.b16 %v34
    %v55 = vpack.c.b16 %v54, %v53
    %v73 = vunpack.c.l.b16 %v35
    %v74 = vunpack.c.l.b16 %v36
    %v75 = vunpack.c.l.b16 %v37
    %v76 = vunpack.c.l.b16 %v38
    %v77 = vunpack.c.l.b16 %v39
    %v78 = vunpack.c.l.b16 %v40
    %v79 = vunpack.c.l.b16 %v41
    %v80 = vunpack.c.l.b16 %v42
    %v81 = vunpack.c.l.b16 %v43
    %v82 = vunpack.c.l.b16 %v44
    %v83 = vunpack.c.l.b16 %v45
    %v84 = vunpack.c.l.b16 %v46
    %v85 = vunpack.c.l.b16 %v47
    %v86 = vunpack.c.l.b16 %v48
    %v87 = vunpack.c.l.b16 %v49
    %v88 = vunpack.c.l.b16 %v50
    %v89 = vpack.c.b16 %v74, %v73
    %v90 = vpack.c.b16 %v76, %v75
    %v91 = vpack.c.b16 %v78, %v77
    %v92 = vpack.c.b16 %v80, %v79
    %v93 = vpack.c.b16 %v82, %v81
    %v94 = vpack.c.b16 %v84, %v83
    %v95 = vpack.c.b16 %v86, %v85
    %v96 = vpack.c.b16 %v88, %v87
    %105 = vmatpush.bf16.msra.mxu0 %v96
    %106 = vmatpush.bf16.msra.mxu0 %v95
    %107 = vmatpush.bf16.msra.mxu0 %v94
    %108 = vmatpush.bf16.msra.mxu0 %v93
    %109 = vmatpush.bf16.msra.mxu0 %v92
    %110 = vmatpush.bf16.msra.mxu0 %v91
    %111 = vmatpush.bf16.msra.mxu0 %v90
    %112 = vmatpush.bf16.msra.mxu0 %v89
    %113 = vmatmul.bf16.gmra.mxu0 %v55
    %v114 = vpop.f32.mrf.mxu0
    %v115 = vadd.f32 0.0, %v114
    %v116 = vpop.f32.mrf.mxu0
    %v117 = vadd.f32 0.0, %v116
    %118 = vdwg.mxu0
    %v119 = vmul.f32 %v115, 14.285714
    %v120 = vmul.f32 %v117, 14.285714
    %s121 = smul.u32 0, 16
    %v122 = vlaneseq
    %v123 = vshrl.u32 %v122, 7
    %v124 = vadd.s32 %v123, 8
    %v125 = vstv %s121
    %v126 = vadd.s32 %v125, %v123
    %v127 = vadd.s32 %v125, %v124
    %v128 = vlaneseq
    %v129 = vand.u32 %v128, 127
    %vm130 = vcmp.ne.s32.totalorder %v126, %v129
    %vm131 = vcmp.ne.s32.totalorder %v127, %v129
    %vm132 = vcmp.lt.s32.totalorder %v129, 16
    %v133 = vsel %vm132, 1, 0
    %vm134 = vcmp.eq.s32.totalorder %v133, 1
    %vm135 = vmand %vm130, %vm134
    %vm136 = vmand %vm131, %vm134
    %v137 = vld [vmem:[%s0] sm:$0xff]
    %v138 = vld [vmem:[%s0 + $0x8] sm:$0xff]
    %v139 = vld [vmem:[%s1] sm:$0x1]
    %140 = vset.pattern.permute.xlu0 0
    %141 = vperm.xlu0 %140, %v137
    %v142 = vpop.permute.xlu0 %141
    %143 = vset.pattern.permute.xlu0 0
    %144 = vperm.xlu0 %143, %v138
    %v145 = vpop.permute.xlu0 %144
    %v146 = vperm.slane %v139, 0
    %vm147 = vcmp.eq.s32.totalorder %v142, %v146
    %vm148 = vcmp.eq.s32.totalorder %v145, %v146
    %vm149 = vmand %vm147, %vm135
    %vm150 = vmand %vm148, %vm136
    %v151 = vsel %vm149, 1, 0
    %v152 = vsel %vm150, 1, 0
    %v153 = vcvt.s32.f32 %v151
    %v154 = vcvt.s32.f32 %v152
    %v155 = vsel %vm135, 1, 0
    %v156 = vsel %vm136, 1, 0
    %v157 = vcvt.s32.f32 %v155
    %v158 = vcvt.s32.f32 %v156
    %159 = vmax.xlane.f32.xlu0 %v119
    %v160 = vpop.xlane.xlu0 %159
    %161 = vmax.xlane.f32.xlu0 %v120
    %v162 = vpop.xlane.xlu0 %161
    %v163 = vsub.f32 %v119, %v160
    %v164 = vsub.f32 %v120, %v162
    %v165 = vmul.f32 %v163, 1.442695
    %v166 = vpow.pop %v165
    %v167 = vmul.f32 %v164, 1.442695
    %v168 = vpow.pop %v167
    %v169 = vmul.f32 %v166, %v157
    %v170 = vmul.f32 %v168, %v158
    %171 = vadd.xlane.f32.xlu0 %v169
    %v172 = vpop.xlane.xlu0 %171
    %173 = vadd.xlane.f32.xlu0 %v170
    %v174 = vpop.xlane.xlu0 %173
    %v175 = vmul.f32 %v153, %v119
    %v176 = vmul.f32 %v154, %v120
    %177 = vadd.xlane.f32.xlu0 %v175
    %v178 = vpop.xlane.xlu0 %177
    %179 = vadd.xlane.f32.xlu0 %v176
    %v180 = vpop.xlane.xlu0 %179
    %181 = vadd.xlane.f32.xlu0 %v153
    %v182 = vpop.xlane.xlu0 %181
    %183 = vadd.xlane.f32.xlu0 %v154
    %v184 = vpop.xlane.xlu0 %183
    %v185 = vlog2.pop %v172
    %v186 = vmul.f32 %v185, 0.6931472
    %v187 = vlog2.pop %v174
    %v188 = vmul.f32 %v187, 0.6931472
    %v189 = vadd.f32 %v160, %v186
    %v190 = vadd.f32 %v162, %v188
    %v191 = vmax.f32 %v182, 1.0
    %v192 = vmax.f32 %v184, 1.0
    %v193 = vrcp.pop %v191
    %v194 = vmul.f32 %v191, %v193
    %v195 = vsub.f32 1.0, %v194
    %v196 = vmul.f32 %v193, %v195
    %v197 = vadd.f32 %v193, %v196
    %vm198 = vweird.f32 %v191
    %vm199 = vweird.f32 %v193
    %vm200 = vmor %vm198, %vm199
    %v201 = vsel %vm200, %v193, %v197
    %v202 = vand.u32 2147483647, %v191
    %vm203 = vcmp.eq.f32.partialorder %v202, 8.507059e+37
    %v204 = vand.u32 %v191, 2147483648
    %v205 = vor.u32 1.1754944e-38, %v204
    %v206 = vsel %vm203, %v205, %v201
    %v207 = vmul.f32 %v178, %v206
    %v208 = vrcp.pop %v192
    %v209 = vmul.f32 %v192, %v208
    %v210 = vsub.f32 1.0, %v209
    %v211 = vmul.f32 %v208, %v210
    %v212 = vadd.f32 %v208, %v211
    %vm213 = vweird.f32 %v192
    %vm214 = vweird.f32 %v208
    %vm215 = vmor %vm213, %vm214
    %v216 = vsel %vm215, %v208, %v212
    %v217 = vand.u32 2147483647, %v192
    %vm218 = vcmp.eq.f32.partialorder %v217, 8.507059e+37
    %v219 = vand.u32 %v192, 2147483648
    %v220 = vor.u32 1.1754944e-38, %v219
    %v221 = vsel %vm218, %v220, %v216
    %v222 = vmul.f32 %v180, %v221
    %v223 = vsub.f32 %v207, %v189
    %v224 = vsub.f32 %v222, %v190
    %vm225 = vcmp.gt.f32.partialorder %v182, 0.0
    %vm226 = vcmp.gt.f32.partialorder %v184, 0.0
    %v227 = vmul.f32 %v223, -1.0
    %v228 = vmul.f32 %v224, -1.0
    %v229 = vsel %vm225, %v227, 0.0
    %v230 = vsel %vm226, %v228, 0.0
    %vm231 = vcmask 7168
    %232 = vst.msk [vmem:[%s4] sm:$0xff] %vm231, %v229
    %233 = vst.msk [vmem:[%s4 + $0x8] sm:$0xff] %vm231, %v230
    // Predicated region
    $region22: #{tpu_custom_call.1} parent=1 // pred_check
      _
    $region23: #{tpu_custom_call.1} parent=1 // pred_check_branch
      %235 = sbr.rel (0) target = $region25
    $region24: #{tpu_custom_call.1} parent=1 // pred_region
      _
    $region25: #{tpu_custom_call.1} parent=1 // pred_fallthru
      _
    // Predicated region
    $region26: #{tpu_custom_call.1} parent=1 // pred_check
      _
    $region27: #{tpu_custom_call.1} parent=1 // pred_check_branch
      %237 = sbr.rel (0) target = $region29
    $region28: #{tpu_custom_call.1} parent=1 // pred_region
      _
    $region29: #{tpu_custom_call.1} parent=1 // pred_fallthru
      _
    %238 = vsyncpa [#allocation3], 1

</llo_original>
